<compile_context>
chip_gen: v6e
topology: v6e:2x2x1
jax: 0.10.0
libtpu: 0.0.40
codegen_flags: <defaults>
</compile_context>

<pallas_src>
import math

import jax
import jax.numpy as jnp
from jax.experimental import pallas as pl
from jax.experimental.pallas import tpu as pltpu


def _border_masks(H, W):
    """(9, 1, H*W) float32 0/1 masks: validity of each 3x3 tap at each pixel."""
    h_idx = jnp.arange(H, dtype=jnp.int32).reshape(H, 1)
    w_idx = jnp.arange(W, dtype=jnp.int32).reshape(1, W)
    masks = []
    for kh in range(3):
        for kw in range(3):
            dh, dw = kh - 1, kw - 1
            valid = ((h_idx + dh >= 0) & (h_idx + dh < H) &
                     (w_idx + dw >= 0) & (w_idx + dw < W))
            masks.append(valid.reshape(1, H * W))
    return jnp.stack(masks, axis=0).astype(jnp.float32)


def _make_resblock_kernel(H, W, res_scale):
    HW = H * W

    def _im2col(x2d, mask_ref):
        # x2d: (C, HW) f32.  Returns the (9*C, HW) im2col slab for a 3x3
        # "same" conv.  Tap (kh, kw) is a static rotation of the flattened
        # image by (kh-1)*W + (kw-1); positions whose source pixel would be
        # outside the image (including cross-row wrap) are zeroed by the
        # precomputed mask.
        taps = []
        for kh in range(3):
            for kw in range(3):
                t = kh * 3 + kw
                off = ((kh - 1) * W + (kw - 1)) % HW
                if off == 0:
                    shifted = x2d                       # center tap
                else:
                    shifted = jnp.concatenate(
                        [x2d[:, off:], x2d[:, :off]], axis=1)
                if not (kh == 1 and kw == 1):
                    shifted = shifted * mask_ref[t]     # (1, HW) broadcast
                taps.append(shifted)
        return jnp.concatenate(taps, axis=0)            # (9C, HW)

    def kernel(x_ref, mask_ref, w1_ref, b1_ref, w2_ref, b2_ref, o_ref):
        # x_ref   : (1, C, HW) f32   one image, channel-major, flat spatial
        # mask_ref: (9, 1, HW) f32   border-validity masks (shared by convs)
        # w1_ref  : (C, 9C)   bf16   conv1 weights, [co, (kh*3+kw)*C + ci]
        # b1_ref  : (C, 1)    f32
        # w2_ref  : (C, 9C)   bf16
        # b2_ref  : (C, 1)    f32
        # o_ref   : (1, C, HW) f32
        x = x_ref[0]                                          # (C, HW) f32

        # ---- conv1: single im2col matmul, bf16 operands, f32 accumulate ----
        slab1 = _im2col(x, mask_ref).astype(jnp.bfloat16)     # (9C, HW)
        h1 = jnp.dot(w1_ref[...], slab1,
                     preferred_element_type=jnp.float32)      # (C, HW) f32
        h1 = jnp.maximum(h1 + b1_ref[...], 0.0)               # bias + ReLU

        # ---- conv2: same structure, directly from the in-register h1 ----
        slab2 = _im2col(h1, mask_ref).astype(jnp.bfloat16)
        out = jnp.dot(w2_ref[...], slab2,
                      preferred_element_type=jnp.float32) + b2_ref[...]

        # ---- residual: identity + out * res_scale (f32) ----
        o_ref[0] = (x + out * res_scale).astype(o_ref.dtype)

    return kernel


def residual_block_no_bn(x_nchw, w1, b1, w2, b2, res_scale=1.0):
    """x_nchw: (N, C, H, W) float32.  w*: (Cout, Cin, 3, 3) PyTorch layout."""
    N, C, H, W = x_nchw.shape
    HW = H * W

    # Free, contiguous reshape (no transpose / pad HBM passes).
    x_flat = x_nchw.reshape(N, C, HW).astype(jnp.float32)

    # (Cout, Cin, kh, kw) -> (Cout, kh, kw, Cin) -> (Cout, 9*Cin), bf16 for MXU.
    w1m = jnp.transpose(w1, (0, 2, 3, 1)).reshape(C, 9 * C).astype(jnp.bfloat16)
    w2m = jnp.transpose(w2, (0, 2, 3, 1)).reshape(C, 9 * C).astype(jnp.bfloat16)
    b1c = b1.reshape(C, 1).astype(jnp.float32)
    b2c = b2.reshape(C, 1).astype(jnp.float32)

    masks = _border_masks(H, W)                               # (9, 1, HW)

    kernel = _make_resblock_kernel(H, W, float(res_scale))

    out_flat = pl.pallas_call(
        kernel,
        out_shape=jax.ShapeDtypeStruct((N, C, HW), jnp.float32),
        grid_spec=pltpu.PrefetchScalarGridSpec(
            num_scalar_prefetch=0,
            grid=(N,),
            in_specs=[
                pl.BlockSpec((1, C, HW), lambda b: (b, 0, 0)),      # x
                pl.BlockSpec((9, 1, HW), lambda b: (0, 0, 0)),      # masks
                pl.BlockSpec((C, 9 * C), lambda b: (0, 0)),         # w1
                pl.BlockSpec((C, 1), lambda b: (0, 0)),             # b1
                pl.BlockSpec((C, 9 * C), lambda b: (0, 0)),         # w2
                pl.BlockSpec((C, 1), lambda b: (0, 0)),             # b2
            ],
            out_specs=pl.BlockSpec((1, C, HW), lambda b: (b, 0, 0)),
        ),
        compiler_params=pltpu.CompilerParams(
            dimension_semantics=("parallel",),
        ),
    )(x_flat, masks, w1m, b1c, w2m, b2c)

    return out_flat.reshape(N, C, H, W)


def _kaiming_normal_scaled(key, c_out, c_in, k, scale):
    # kaiming_normal_ default: fan_in mode, gain sqrt(2) -> std = sqrt(2/fan_in)
    fan_in = c_in * k * k
    std = math.sqrt(2.0 / fan_in)
    w = jax.random.normal(key, (c_out, c_in, k, k), jnp.float32) * std
    return w * scale


def _reference(x, w1, b1, w2, b2, res_scale, matmul_dtype=jnp.float32):
    """Pure-JAX reference.  matmul_dtype=bf16 mirrors the kernel's operand
    rounding (f32 accumulation either way)."""
    dn = jax.lax.conv_dimension_numbers(x.shape, w1.shape,
                                        ("NCHW", "OIHW", "NCHW"))

    def conv(inp, w):
        return jax.lax.conv_general_dilated(
            inp.astype(matmul_dtype), w.astype(matmul_dtype), (1, 1),
            ((1, 1), (1, 1)), dimension_numbers=dn,
            preferred_element_type=jnp.float32)

    h = jnp.maximum(conv(x, w1) + b1.reshape(1, -1, 1, 1), 0.0)
    o = conv(h, w2) + b2.reshape(1, -1, 1, 1)
    return x + o * res_scale


if __name__ == "__main__":
    num_feat = 4
    N, H, W = 2, 16, 16
    res_scale = 0.5

    key = jax.random.PRNGKey(0)
    kx, kw1, kw2, kb1, kb2 = jax.random.split(key, 5)

    x = jax.random.normal(kx, (N, num_feat, H, W), jnp.float32)
    # default_init_weights([conv1, conv2], scale=0.1)
    w1 = _kaiming_normal_scaled(kw1, num_feat, num_feat, 3, 0.1)
    w2 = _kaiming_normal_scaled(kw2, num_feat, num_feat, 3, 0.1)
    # Module default fills biases with 0; use small non-zero biases here so
    # the bias path is actually exercised by the correctness check.
    b1 = 0.05 * jax.random.normal(kb1, (num_feat,), jnp.float32)
    b2 = 0.05 * jax.random.normal(kb2, (num_feat,), jnp.float32)

    out = residual_block_no_bn(x, w1, b1, w2, b2, res_scale)
    out = jax.block_until_ready(out)
    assert out.shape == (N, num_feat, H, W)

    # Tight check against a reference with the same bf16 operand rounding.
    ref_bf16 = _reference(x, w1, b1, w2, b2, res_scale,
                          matmul_dtype=jnp.bfloat16)
    assert jnp.allclose(out, ref_bf16, atol=2e-3, rtol=2e-3)

    # Module-semantics check against the pure f32 reference (difference is
    # only the bf16 operand rounding of the two convolutions).
    ref_f32 = _reference(x, w1, b1, w2, b2, res_scale,
                         matmul_dtype=jnp.float32)
    assert jnp.allclose(out, ref_f32, atol=2e-2, rtol=2e-2)

    print("KERNEL_OK")
</pallas_src>

<mosaic_0001>
module attributes {stable_mosaic.version = 11 : i64} {
  func.func @kernel(%arg0: i32, %arg1: memref<1x4x256xf32, #tpu.memory_space<vmem>>, %arg2: memref<9x1x256xf32, #tpu.memory_space<vmem>>, %arg3: memref<4x36xbf16, #tpu.memory_space<vmem>>, %arg4: memref<4x1xf32, #tpu.memory_space<vmem>>, %arg5: memref<4x36xbf16, #tpu.memory_space<vmem>>, %arg6: memref<4x1xf32, #tpu.memory_space<vmem>>, %arg7: memref<1x4x256xf32, #tpu.memory_space<vmem>>) attributes {dimension_semantics = [#tpu.dimension_semantics<parallel>], iteration_bounds = array<i64: 2>, scalar_prefetch = 0 : i64, scratch_operands = 0 : i64, tpu.core_type = #tpu.core_type<tc>, window_params = [{transform_indices = @transform_0, window_bounds = array<i64: 1, 4, 256>}, {pipeline_mode = #tpu.pipeline_mode<synchronous>, transform_indices = @transform_1, window_bounds = array<i64: 9, 1, 256>}, {pipeline_mode = #tpu.pipeline_mode<synchronous>, transform_indices = @transform_2, window_bounds = array<i64: 4, 36>}, {pipeline_mode = #tpu.pipeline_mode<synchronous>, transform_indices = @transform_3, window_bounds = array<i64: 4, 1>}, {pipeline_mode = #tpu.pipeline_mode<synchronous>, transform_indices = @transform_4, window_bounds = array<i64: 4, 36>}, {pipeline_mode = #tpu.pipeline_mode<synchronous>, transform_indices = @transform_5, window_bounds = array<i64: 4, 1>}, {transform_indices = @transform_6, window_bounds = array<i64: 1, 4, 256>}]} {
    %c0 = arith.constant 0 : index
    %c0_0 = arith.constant 0 : index
    %c0_1 = arith.constant 0 : index
    %0 = vector.load %arg1[%c0, %c0_0, %c0_1] : memref<1x4x256xf32, #tpu.memory_space<vmem>>, vector<1x4x256xf32>
    %1 = vector.shape_cast %0 : vector<1x4x256xf32> to vector<4x256xf32>
    %2 = vector.extract_strided_slice %1 {offsets = [0, 239], sizes = [4, 17], strides = [1, 1]} : vector<4x256xf32> to vector<4x17xf32>
    %3 = vector.extract_strided_slice %1 {offsets = [0, 0], sizes = [4, 239], strides = [1, 1]} : vector<4x256xf32> to vector<4x239xf32>
    %4 = tpu.concatenate %2, %3 in 1 : vector<4x17xf32>, vector<4x239xf32> -> vector<4x256xf32>
    %c0_2 = arith.constant 0 : index
    %c0_3 = arith.constant 0 : index
    %c0_4 = arith.constant 0 : index
    %5 = vector.load %arg2[%c0_2, %c0_3, %c0_4] : memref<9x1x256xf32, #tpu.memory_space<vmem>>, vector<1x1x256xf32>
    %6 = vector.shape_cast %5 : vector<1x1x256xf32> to vector<1x256xf32>
    %7 = vector.broadcast %6 : vector<1x256xf32> to vector<4x256xf32>
    %8 = arith.mulf %4, %7 : vector<4x256xf32>
    %9 = vector.extract_strided_slice %1 {offsets = [0, 240], sizes = [4, 16], strides = [1, 1]} : vector<4x256xf32> to vector<4x16xf32>
    %10 = vector.extract_strided_slice %1 {offsets = [0, 0], sizes = [4, 240], strides = [1, 1]} : vector<4x256xf32> to vector<4x240xf32>
    %11 = tpu.concatenate %9, %10 in 1 : vector<4x16xf32>, vector<4x240xf32> -> vector<4x256xf32>
    %c1 = arith.constant 1 : index
    %c0_5 = arith.constant 0 : index
    %c0_6 = arith.constant 0 : index
    %12 = vector.load %arg2[%c1, %c0_5, %c0_6] : memref<9x1x256xf32, #tpu.memory_space<vmem>>, vector<1x1x256xf32>
    %13 = vector.shape_cast %12 : vector<1x1x256xf32> to vector<1x256xf32>
    %14 = vector.broadcast %13 : vector<1x256xf32> to vector<4x256xf32>
    %15 = arith.mulf %11, %14 : vector<4x256xf32>
    %16 = vector.extract_strided_slice %1 {offsets = [0, 241], sizes = [4, 15], strides = [1, 1]} : vector<4x256xf32> to vector<4x15xf32>
    %17 = vector.extract_strided_slice %1 {offsets = [0, 0], sizes = [4, 241], strides = [1, 1]} : vector<4x256xf32> to vector<4x241xf32>
    %18 = tpu.concatenate %16, %17 in 1 : vector<4x15xf32>, vector<4x241xf32> -> vector<4x256xf32>
    %c2 = arith.constant 2 : index
    %c0_7 = arith.constant 0 : index
    %c0_8 = arith.constant 0 : index
    %19 = vector.load %arg2[%c2, %c0_7, %c0_8] : memref<9x1x256xf32, #tpu.memory_space<vmem>>, vector<1x1x256xf32>
    %20 = vector.shape_cast %19 : vector<1x1x256xf32> to vector<1x256xf32>
    %21 = vector.broadcast %20 : vector<1x256xf32> to vector<4x256xf32>
    %22 = arith.mulf %18, %21 : vector<4x256xf32>
    %23 = vector.extract_strided_slice %1 {offsets = [0, 255], sizes = [4, 1], strides = [1, 1]} : vector<4x256xf32> to vector<4x1xf32>
    %24 = vector.extract_strided_slice %1 {offsets = [0, 0], sizes = [4, 255], strides = [1, 1]} : vector<4x256xf32> to vector<4x255xf32>
    %25 = tpu.concatenate %23, %24 in 1 : vector<4x1xf32>, vector<4x255xf32> -> vector<4x256xf32>
    %c3 = arith.constant 3 : index
    %c0_9 = arith.constant 0 : index
    %c0_10 = arith.constant 0 : index
    %26 = vector.load %arg2[%c3, %c0_9, %c0_10] : memref<9x1x256xf32, #tpu.memory_space<vmem>>, vector<1x1x256xf32>
    %27 = vector.shape_cast %26 : vector<1x1x256xf32> to vector<1x256xf32>
    %28 = vector.broadcast %27 : vector<1x256xf32> to vector<4x256xf32>
    %29 = arith.mulf %25, %28 : vector<4x256xf32>
    %30 = vector.extract_strided_slice %1 {offsets = [0, 1], sizes = [4, 255], strides = [1, 1]} : vector<4x256xf32> to vector<4x255xf32>
    %31 = vector.extract_strided_slice %1 {offsets = [0, 0], sizes = [4, 1], strides = [1, 1]} : vector<4x256xf32> to vector<4x1xf32>
    %32 = tpu.concatenate %30, %31 in 1 : vector<4x255xf32>, vector<4x1xf32> -> vector<4x256xf32>
    %c5 = arith.constant 5 : index
    %c0_11 = arith.constant 0 : index
    %c0_12 = arith.constant 0 : index
    %33 = vector.load %arg2[%c5, %c0_11, %c0_12] : memref<9x1x256xf32, #tpu.memory_space<vmem>>, vector<1x1x256xf32>
    %34 = vector.shape_cast %33 : vector<1x1x256xf32> to vector<1x256xf32>
    %35 = vector.broadcast %34 : vector<1x256xf32> to vector<4x256xf32>
    %36 = arith.mulf %32, %35 : vector<4x256xf32>
    %37 = vector.extract_strided_slice %1 {offsets = [0, 15], sizes = [4, 241], strides = [1, 1]} : vector<4x256xf32> to vector<4x241xf32>
    %38 = vector.extract_strided_slice %1 {offsets = [0, 0], sizes = [4, 15], strides = [1, 1]} : vector<4x256xf32> to vector<4x15xf32>
    %39 = tpu.concatenate %37, %38 in 1 : vector<4x241xf32>, vector<4x15xf32> -> vector<4x256xf32>
    %c6 = arith.constant 6 : index
    %c0_13 = arith.constant 0 : index
    %c0_14 = arith.constant 0 : index
    %40 = vector.load %arg2[%c6, %c0_13, %c0_14] : memref<9x1x256xf32, #tpu.memory_space<vmem>>, vector<1x1x256xf32>
    %41 = vector.shape_cast %40 : vector<1x1x256xf32> to vector<1x256xf32>
    %42 = vector.broadcast %41 : vector<1x256xf32> to vector<4x256xf32>
    %43 = arith.mulf %39, %42 : vector<4x256xf32>
    %44 = vector.extract_strided_slice %1 {offsets = [0, 16], sizes = [4, 240], strides = [1, 1]} : vector<4x256xf32> to vector<4x240xf32>
    %45 = vector.extract_strided_slice %1 {offsets = [0, 0], sizes = [4, 16], strides = [1, 1]} : vector<4x256xf32> to vector<4x16xf32>
    %46 = tpu.concatenate %44, %45 in 1 : vector<4x240xf32>, vector<4x16xf32> -> vector<4x256xf32>
    %c7 = arith.constant 7 : index
    %c0_15 = arith.constant 0 : index
    %c0_16 = arith.constant 0 : index
    %47 = vector.load %arg2[%c7, %c0_15, %c0_16] : memref<9x1x256xf32, #tpu.memory_space<vmem>>, vector<1x1x256xf32>
    %48 = vector.shape_cast %47 : vector<1x1x256xf32> to vector<1x256xf32>
    %49 = vector.broadcast %48 : vector<1x256xf32> to vector<4x256xf32>
    %50 = arith.mulf %46, %49 : vector<4x256xf32>
    %51 = vector.extract_strided_slice %1 {offsets = [0, 17], sizes = [4, 239], strides = [1, 1]} : vector<4x256xf32> to vector<4x239xf32>
    %52 = vector.extract_strided_slice %1 {offsets = [0, 0], sizes = [4, 17], strides = [1, 1]} : vector<4x256xf32> to vector<4x17xf32>
    %53 = tpu.concatenate %51, %52 in 1 : vector<4x239xf32>, vector<4x17xf32> -> vector<4x256xf32>
    %c8 = arith.constant 8 : index
    %c0_17 = arith.constant 0 : index
    %c0_18 = arith.constant 0 : index
    %54 = vector.load %arg2[%c8, %c0_17, %c0_18] : memref<9x1x256xf32, #tpu.memory_space<vmem>>, vector<1x1x256xf32>
    %55 = vector.shape_cast %54 : vector<1x1x256xf32> to vector<1x256xf32>
    %56 = vector.broadcast %55 : vector<1x256xf32> to vector<4x256xf32>
    %57 = arith.mulf %53, %56 : vector<4x256xf32>
    %58 = tpu.concatenate %8, %15, %22, %29, %1, %36, %43, %50, %57 in 0 : vector<4x256xf32>, vector<4x256xf32>, vector<4x256xf32>, vector<4x256xf32>, vector<4x256xf32>, vector<4x256xf32>, vector<4x256xf32>, vector<4x256xf32>, vector<4x256xf32> -> vector<36x256xf32>
    %59 = arith.truncf %58 : vector<36x256xf32> to vector<36x256xbf16>
    %c0_19 = arith.constant 0 : index
    %c0_20 = arith.constant 0 : index
    %60 = vector.load %arg3[%c0_19, %c0_20] : memref<4x36xbf16, #tpu.memory_space<vmem>>, vector<4x36xbf16>
    %cst = arith.constant dense<0.000000e+00> : vector<4x256xf32>
    %61 = tpu.matmul %60, %59, %cst {dimension_numbers = #tpu.dot_dimension_numbers<[1], [0], [0], [1], [0, 0, 1, 1], [], []>} : vector<4x36xbf16>, vector<36x256xbf16>, vector<4x256xf32> -> vector<4x256xf32>
    %c0_21 = arith.constant 0 : index
    %c0_22 = arith.constant 0 : index
    %62 = vector.load %arg4[%c0_21, %c0_22] : memref<4x1xf32, #tpu.memory_space<vmem>>, vector<4x1xf32>
    %63 = vector.broadcast %62 : vector<4x1xf32> to vector<4x256xf32>
    %64 = arith.addf %61, %63 : vector<4x256xf32>
    %cst_23 = arith.constant 0.000000e+00 : f32
    %65 = vector.broadcast %cst_23 : f32 to vector<4x256xf32>
    %66 = arith.maximumf %64, %65 : vector<4x256xf32>
    %67 = vector.extract_strided_slice %66 {offsets = [0, 239], sizes = [4, 17], strides = [1, 1]} : vector<4x256xf32> to vector<4x17xf32>
    %68 = vector.extract_strided_slice %66 {offsets = [0, 0], sizes = [4, 239], strides = [1, 1]} : vector<4x256xf32> to vector<4x239xf32>
    %69 = tpu.concatenate %67, %68 in 1 : vector<4x17xf32>, vector<4x239xf32> -> vector<4x256xf32>
    %c0_24 = arith.constant 0 : index
    %c0_25 = arith.constant 0 : index
    %c0_26 = arith.constant 0 : index
    %70 = vector.load %arg2[%c0_24, %c0_25, %c0_26] : memref<9x1x256xf32, #tpu.memory_space<vmem>>, vector<1x1x256xf32>
    %71 = vector.shape_cast %70 : vector<1x1x256xf32> to vector<1x256xf32>
    %72 = vector.broadcast %71 : vector<1x256xf32> to vector<4x256xf32>
    %73 = arith.mulf %69, %72 : vector<4x256xf32>
    %74 = vector.extract_strided_slice %66 {offsets = [0, 240], sizes = [4, 16], strides = [1, 1]} : vector<4x256xf32> to vector<4x16xf32>
    %75 = vector.extract_strided_slice %66 {offsets = [0, 0], sizes = [4, 240], strides = [1, 1]} : vector<4x256xf32> to vector<4x240xf32>
    %76 = tpu.concatenate %74, %75 in 1 : vector<4x16xf32>, vector<4x240xf32> -> vector<4x256xf32>
    %c1_27 = arith.constant 1 : index
    %c0_28 = arith.constant 0 : index
    %c0_29 = arith.constant 0 : index
    %77 = vector.load %arg2[%c1_27, %c0_28, %c0_29] : memref<9x1x256xf32, #tpu.memory_space<vmem>>, vector<1x1x256xf32>
    %78 = vector.shape_cast %77 : vector<1x1x256xf32> to vector<1x256xf32>
    %79 = vector.broadcast %78 : vector<1x256xf32> to vector<4x256xf32>
    %80 = arith.mulf %76, %79 : vector<4x256xf32>
    %81 = vector.extract_strided_slice %66 {offsets = [0, 241], sizes = [4, 15], strides = [1, 1]} : vector<4x256xf32> to vector<4x15xf32>
    %82 = vector.extract_strided_slice %66 {offsets = [0, 0], sizes = [4, 241], strides = [1, 1]} : vector<4x256xf32> to vector<4x241xf32>
    %83 = tpu.concatenate %81, %82 in 1 : vector<4x15xf32>, vector<4x241xf32> -> vector<4x256xf32>
    %c2_30 = arith.constant 2 : index
    %c0_31 = arith.constant 0 : index
    %c0_32 = arith.constant 0 : index
    %84 = vector.load %arg2[%c2_30, %c0_31, %c0_32] : memref<9x1x256xf32, #tpu.memory_space<vmem>>, vector<1x1x256xf32>
    %85 = vector.shape_cast %84 : vector<1x1x256xf32> to vector<1x256xf32>
    %86 = vector.broadcast %85 : vector<1x256xf32> to vector<4x256xf32>
    %87 = arith.mulf %83, %86 : vector<4x256xf32>
    %88 = vector.extract_strided_slice %66 {offsets = [0, 255], sizes = [4, 1], strides = [1, 1]} : vector<4x256xf32> to vector<4x1xf32>
    %89 = vector.extract_strided_slice %66 {offsets = [0, 0], sizes = [4, 255], strides = [1, 1]} : vector<4x256xf32> to vector<4x255xf32>
    %90 = tpu.concatenate %88, %89 in 1 : vector<4x1xf32>, vector<4x255xf32> -> vector<4x256xf32>
    %c3_33 = arith.constant 3 : index
    %c0_34 = arith.constant 0 : index
    %c0_35 = arith.constant 0 : index
    %91 = vector.load %arg2[%c3_33, %c0_34, %c0_35] : memref<9x1x256xf32, #tpu.memory_space<vmem>>, vector<1x1x256xf32>
    %92 = vector.shape_cast %91 : vector<1x1x256xf32> to vector<1x256xf32>
    %93 = vector.broadcast %92 : vector<1x256xf32> to vector<4x256xf32>
    %94 = arith.mulf %90, %93 : vector<4x256xf32>
    %95 = vector.extract_strided_slice %66 {offsets = [0, 1], sizes = [4, 255], strides = [1, 1]} : vector<4x256xf32> to vector<4x255xf32>
    %96 = vector.extract_strided_slice %66 {offsets = [0, 0], sizes = [4, 1], strides = [1, 1]} : vector<4x256xf32> to vector<4x1xf32>
    %97 = tpu.concatenate %95, %96 in 1 : vector<4x255xf32>, vector<4x1xf32> -> vector<4x256xf32>
    %c5_36 = arith.constant 5 : index
    %c0_37 = arith.constant 0 : index
    %c0_38 = arith.constant 0 : index
    %98 = vector.load %arg2[%c5_36, %c0_37, %c0_38] : memref<9x1x256xf32, #tpu.memory_space<vmem>>, vector<1x1x256xf32>
    %99 = vector.shape_cast %98 : vector<1x1x256xf32> to vector<1x256xf32>
    %100 = vector.broadcast %99 : vector<1x256xf32> to vector<4x256xf32>
    %101 = arith.mulf %97, %100 : vector<4x256xf32>
    %102 = vector.extract_strided_slice %66 {offsets = [0, 15], sizes = [4, 241], strides = [1, 1]} : vector<4x256xf32> to vector<4x241xf32>
    %103 = vector.extract_strided_slice %66 {offsets = [0, 0], sizes = [4, 15], strides = [1, 1]} : vector<4x256xf32> to vector<4x15xf32>
    %104 = tpu.concatenate %102, %103 in 1 : vector<4x241xf32>, vector<4x15xf32> -> vector<4x256xf32>
    %c6_39 = arith.constant 6 : index
    %c0_40 = arith.constant 0 : index
    %c0_41 = arith.constant 0 : index
    %105 = vector.load %arg2[%c6_39, %c0_40, %c0_41] : memref<9x1x256xf32, #tpu.memory_space<vmem>>, vector<1x1x256xf32>
    %106 = vector.shape_cast %105 : vector<1x1x256xf32> to vector<1x256xf32>
    %107 = vector.broadcast %106 : vector<1x256xf32> to vector<4x256xf32>
    %108 = arith.mulf %104, %107 : vector<4x256xf32>
    %109 = vector.extract_strided_slice %66 {offsets = [0, 16], sizes = [4, 240], strides = [1, 1]} : vector<4x256xf32> to vector<4x240xf32>
    %110 = vector.extract_strided_slice %66 {offsets = [0, 0], sizes = [4, 16], strides = [1, 1]} : vector<4x256xf32> to vector<4x16xf32>
    %111 = tpu.concatenate %109, %110 in 1 : vector<4x240xf32>, vector<4x16xf32> -> vector<4x256xf32>
    %c7_42 = arith.constant 7 : index
    %c0_43 = arith.constant 0 : index
    %c0_44 = arith.constant 0 : index
    %112 = vector.load %arg2[%c7_42, %c0_43, %c0_44] : memref<9x1x256xf32, #tpu.memory_space<vmem>>, vector<1x1x256xf32>
    %113 = vector.shape_cast %112 : vector<1x1x256xf32> to vector<1x256xf32>
    %114 = vector.broadcast %113 : vector<1x256xf32> to vector<4x256xf32>
    %115 = arith.mulf %111, %114 : vector<4x256xf32>
    %116 = vector.extract_strided_slice %66 {offsets = [0, 17], sizes = [4, 239], strides = [1, 1]} : vector<4x256xf32> to vector<4x239xf32>
    %117 = vector.extract_strided_slice %66 {offsets = [0, 0], sizes = [4, 17], strides = [1, 1]} : vector<4x256xf32> to vector<4x17xf32>
    %118 = tpu.concatenate %116, %117 in 1 : vector<4x239xf32>, vector<4x17xf32> -> vector<4x256xf32>
    %c8_45 = arith.constant 8 : index
    %c0_46 = arith.constant 0 : index
    %c0_47 = arith.constant 0 : index
    %119 = vector.load %arg2[%c8_45, %c0_46, %c0_47] : memref<9x1x256xf32, #tpu.memory_space<vmem>>, vector<1x1x256xf32>
    %120 = vector.shape_cast %119 : vector<1x1x256xf32> to vector<1x256xf32>
    %121 = vector.broadcast %120 : vector<1x256xf32> to vector<4x256xf32>
    %122 = arith.mulf %118, %121 : vector<4x256xf32>
    %123 = tpu.concatenate %73, %80, %87, %94, %66, %101, %108, %115, %122 in 0 : vector<4x256xf32>, vector<4x256xf32>, vector<4x256xf32>, vector<4x256xf32>, vector<4x256xf32>, vector<4x256xf32>, vector<4x256xf32>, vector<4x256xf32>, vector<4x256xf32> -> vector<36x256xf32>
    %124 = arith.truncf %123 : vector<36x256xf32> to vector<36x256xbf16>
    %c0_48 = arith.constant 0 : index
    %c0_49 = arith.constant 0 : index
    %125 = vector.load %arg5[%c0_48, %c0_49] : memref<4x36xbf16, #tpu.memory_space<vmem>>, vector<4x36xbf16>
    %cst_50 = arith.constant dense<0.000000e+00> : vector<4x256xf32>
    %126 = tpu.matmul %125, %124, %cst_50 {dimension_numbers = #tpu.dot_dimension_numbers<[1], [0], [0], [1], [0, 0, 1, 1], [], []>} : vector<4x36xbf16>, vector<36x256xbf16>, vector<4x256xf32> -> vector<4x256xf32>
    %c0_51 = arith.constant 0 : index
    %c0_52 = arith.constant 0 : index
    %127 = vector.load %arg6[%c0_51, %c0_52] : memref<4x1xf32, #tpu.memory_space<vmem>>, vector<4x1xf32>
    %128 = vector.broadcast %127 : vector<4x1xf32> to vector<4x256xf32>
    %129 = arith.addf %126, %128 : vector<4x256xf32>
    %cst_53 = arith.constant 5.000000e-01 : f32
    %130 = vector.broadcast %cst_53 : f32 to vector<4x256xf32>
    %131 = arith.mulf %129, %130 : vector<4x256xf32>
    %132 = arith.addf %1, %131 : vector<4x256xf32>
    %c0_54 = arith.constant 0 : index
    %c0_55 = arith.constant 0 : index
    %c0_56 = arith.constant 0 : index
    %133 = vector.load %arg7[%c0_54, %c0_55, %c0_56] : memref<1x4x256xf32, #tpu.memory_space<vmem>>, vector<1x4x256xf32>
    %134 = vector.shape_cast %133 : vector<1x4x256xf32> to vector<4x256xf32>
    %135 = vector.shape_cast %132 : vector<4x256xf32> to vector<1x4x256xf32>
    tpu.vector_store %arg7[%c0_54, %c0_55, %c0_56], %135 {strides = array<i32>} : memref<1x4x256xf32, #tpu.memory_space<vmem>>, vector<1x4x256xf32>,
    return
  }
  func.func @transform_0(%arg0: i32) -> (i32, i32, i32) {
    %c0_i32 = arith.constant 0 : i32
    %c0_i32_0 = arith.constant 0 : i32
    %c0_i32_1 = arith.constant 0 : i32
    return %arg0, %c0_i32, %c0_i32_0 : i32, i32, i32
  }
  func.func @transform_1(%arg0: i32) -> (i32, i32, i32) {
    %c0_i32 = arith.constant 0 : i32
    %c0_i32_0 = arith.constant 0 : i32
    %c0_i32_1 = arith.constant 0 : i32
    %c0_i32_2 = arith.constant 0 : i32
    return %c0_i32, %c0_i32_0, %c0_i32_1 : i32, i32, i32
  }
  func.func @transform_2(%arg0: i32) -> (i32, i32) {
    %c0_i32 = arith.constant 0 : i32
    %c0_i32_0 = arith.constant 0 : i32
    %c0_i32_1 = arith.constant 0 : i32
    return %c0_i32, %c0_i32_0 : i32, i32
  }
  func.func @transform_3(%arg0: i32) -> (i32, i32) {
    %c0_i32 = arith.constant 0 : i32
    %c0_i32_0 = arith.constant 0 : i32
    %c0_i32_1 = arith.constant 0 : i32
    return %c0_i32, %c0_i32_0 : i32, i32
  }
  func.func @transform_4(%arg0: i32) -> (i32, i32) {
    %c0_i32 = arith.constant 0 : i32
    %c0_i32_0 = arith.constant 0 : i32
    %c0_i32_1 = arith.constant 0 : i32
    return %c0_i32, %c0_i32_0 : i32, i32
  }
  func.func @transform_5(%arg0: i32) -> (i32, i32) {
    %c0_i32 = arith.constant 0 : i32
    %c0_i32_0 = arith.constant 0 : i32
    %c0_i32_1 = arith.constant 0 : i32
    return %c0_i32, %c0_i32_0 : i32, i32
  }
  func.func @transform_6(%arg0: i32) -> (i32, i32, i32) {
    %c0_i32 = arith.constant 0 : i32
    %c0_i32_0 = arith.constant 0 : i32
    %c0_i32_1 = arith.constant 0 : i32
    return %arg0, %c0_i32, %c0_i32_0 : i32, i32, i32
  }
}

</mosaic_0001>

<llo_original>
// kernel: tpu_custom_call.1
$region0: #{tpu_custom_call.1}
  #allocation0 [shape = 'u32[]', space=smem, size = 0x4, offset = 0x4, fixed_abs, tag = 'smem constant byte address 0x4 - core index']
  #allocation1 [shape = 'u32[144,128]{1,0:T(1,128)}', space=vmem, size = 0x12000, scoped, tag = 'internal scratch']
  %s0 = inlined_call_operand.hbm [shape: f32[2,4,256], index: 0, kind: input, shape index: {}]
  %s1 = inlined_call_operand.hbm [shape: f32[9,1,256], index: 1, kind: input, shape index: {}]
  %s2 = inlined_call_operand.vmem [shape: bf16[4,36], index: 2, kind: input, shape index: {}]
  %s3 = inlined_call_operand.vmem [shape: f32[4,1], index: 3, kind: input, shape index: {}]
  %s4 = inlined_call_operand.vmem [shape: bf16[4,36], index: 4, kind: input, shape index: {}]
  %s5 = inlined_call_operand.vmem [shape: f32[4,1], index: 5, kind: input, shape index: {}]
  %s6 = inlined_call_operand.hbm [shape: f32[2,4,256], index: 6, kind: output, shape index: {}]
  %s7 = sld [smem:[#allocation0]]
  $region65: #{tpu_custom_call.1} parent=0
    _
  %s9 = ssub.s32 1, %s7
  %s10 = scalar_select 0, %s9, %s7
  $region1: #{tpu_custom_call.1} parent=0
    #allocation2 [shape = 'u8[8192]{0}', space=vmem, size = 0x2000, scoped, tag = 'input window, operand 0']
    #allocation3 [shape = 's32[2]{0}', space=sflag, size = 0x8, scoped, tag = 'scoped memory for tpu_custom_call.1']
    #allocation4 [shape = 's32[2]{0}', space=sflag, size = 0x8, scoped, tag = 'scoped memory for tpu_custom_call.1']
    #allocation5 [shape = 'u8[9216]{0}', space=vmem, size = 0x2400, scoped, tag = 'input window, operand 1, single buffered']
    #allocation6 [shape = 's32[1]{0}', space=sflag, size = 0x4, scoped, tag = 'scoped memory for tpu_custom_call.1']
    #allocation7 [shape = 'u8[8192]{0}', space=vmem, size = 0x2000, scoped, tag = 'output window, operand 0']
    %11 = vsyncpa [#allocation3], 0
    %s12 = scalar_lea.sflag [#allocation3], 1
    %13 = vsyncpa %s12, 0
    %14 = vsyncpa [#allocation6], 0
    %15 = vsyncpa [#allocation4], 0
    %s16 = scalar_lea.sflag [#allocation4], 1
    %17 = vsyncpa %s16, 0
    loop: start=0, step=1, limit=4
    $region2: #{tpu_custom_call.1} parent=1 // loop_pre_header
      _
    $region3: #{tpu_custom_call.1} parent=1 // loop_header
      %s19 = sphi 0, %s23
      %p20 = scmp.ge.s32.totalorder %s19, 4
      %s29 = sphi 0, %s31
      %s32 = sphi 0, %s29
      %s33 = sphi 0, %s32
      %s49 = sphi 0, %s33
      %s53 = sphi 0, %s53
      %s55 = sphi 0, %s53
      %s56 = sphi 0, %s55
      %s70 = sphi 0, %s56
      %s74 = sphi 0, %s74
      %s76 = sphi 0, %s74
      %s77 = sphi 0, %s76
      %s91 = sphi 0, %s77
      %s95 = sphi 0, %s95
      %s97 = sphi 0, %s95
      %s98 = sphi 0, %s97
      %s112 = sphi 0, %s98
      %s116 = sphi 0, %s116
      %s118 = sphi 0, %s116
      %s119 = sphi 0, %s118
      %s133 = sphi 0, %s119
      %s137 = sphi 0, %s137
      %s139 = sphi 0, %s137
      %s140 = sphi 0, %s139
      %s154 = sphi 0, %s140
      %s160 = sphi 0, %s162
      %s163 = sphi 0, %s160
      %s164 = sphi 0, %s163
      %s180 = sphi 0, %s164
    $region4: #{tpu_custom_call.1} parent=1 // loop_header_branch
      %22 = sbr.rel (%p20) target = $region8
    $region5: #{tpu_custom_call.1} parent=1 // loop_body
      %s24 = ssub.s32 %s19, 1
      %s25 = ssub.s32 %s19, 2
      %s26 = sadd.s32 %s19, 1
      %s27 = ssub.s32 %s19, %s26
      %p28 = scmp.eq.s32.totalorder %s27, 0
      %s30 = sadd.s32 %s29, 1
      %s31 = scalar_select %p28, %s29, %s30
      %p34 = pneg %p28
      %p35 = scmp.eq.s32.totalorder %s19, 1
      %p36 = por %p34, %p35
      %p37 = scmp.ne.s32.totalorder %s29, %s32
      %p38 = scmp.eq.s32.totalorder %s19, 0
      %p39 = por %p37, %p38
      %p40 = scmp.ne.s32.totalorder %s29, %s32
      %p41 = scmp.eq.s32.totalorder %s24, 1
      %p42 = por %p40, %p41
      %p43 = scmp.ne.s32.totalorder %s32, %s33
      %p44 = scmp.eq.s32.totalorder %s24, 0
      %p45 = por %p43, %p44
      %p46 = scmp.ne.s32.totalorder %s32, %s33
      %p47 = scmp.eq.s32.totalorder %s25, 1
      %p48 = por %p46, %p47
      %p50 = scmp.ne.s32.totalorder %s33, %s49
      %p51 = scmp.eq.s32.totalorder %s25, 0
      %p52 = por %p50, %p51
      %s54 = sadd.s32 %s53, 1
      %p57 = scmp.eq.s32.totalorder %s19, 1
      %p58 = scmp.ne.s32.totalorder %s53, %s55
      %p59 = scmp.eq.s32.totalorder %s19, 0
      %p60 = por %p58, %p59
      %p61 = scmp.ne.s32.totalorder %s53, %s55
      %p62 = scmp.eq.s32.totalorder %s24, 1
      %p63 = por %p61, %p62
      %p64 = scmp.ne.s32.totalorder %s55, %s56
      %p65 = scmp.eq.s32.totalorder %s24, 0
      %p66 = por %p64, %p65
      %p67 = scmp.ne.s32.totalorder %s55, %s56
      %p68 = scmp.eq.s32.totalorder %s25, 1
      %p69 = por %p67, %p68
      %p71 = scmp.ne.s32.totalorder %s56, %s70
      %p72 = scmp.eq.s32.totalorder %s25, 0
      %p73 = por %p71, %p72
      %s75 = sadd.s32 %s74, 1
      %p78 = scmp.eq.s32.totalorder %s19, 1
      %p79 = scmp.ne.s32.totalorder %s74, %s76
      %p80 = scmp.eq.s32.totalorder %s19, 0
      %p81 = por %p79, %p80
      %p82 = scmp.ne.s32.totalorder %s74, %s76
      %p83 = scmp.eq.s32.totalorder %s24, 1
      %p84 = por %p82, %p83
      %p85 = scmp.ne.s32.totalorder %s76, %s77
      %p86 = scmp.eq.s32.totalorder %s24, 0
      %p87 = por %p85, %p86
      %p88 = scmp.ne.s32.totalorder %s76, %s77
      %p89 = scmp.eq.s32.totalorder %s25, 1
      %p90 = por %p88, %p89
      %p92 = scmp.ne.s32.totalorder %s77, %s91
      %p93 = scmp.eq.s32.totalorder %s25, 0
      %p94 = por %p92, %p93
      %s96 = sadd.s32 %s95, 1
      %p99 = scmp.eq.s32.totalorder %s19, 1
      %p100 = scmp.ne.s32.totalorder %s95, %s97
      %p101 = scmp.eq.s32.totalorder %s19, 0
      %p102 = por %p100, %p101
      %p103 = scmp.ne.s32.totalorder %s95, %s97
      %p104 = scmp.eq.s32.totalorder %s24, 1
      %p105 = por %p103, %p104
      %p106 = scmp.ne.s32.totalorder %s97, %s98
      %p107 = scmp.eq.s32.totalorder %s24, 0
      %p108 = por %p106, %p107
      %p109 = scmp.ne.s32.totalorder %s97, %s98
      %p110 = scmp.eq.s32.totalorder %s25, 1
      %p111 = por %p109, %p110
      %p113 = scmp.ne.s32.totalorder %s98, %s112
      %p114 = scmp.eq.s32.totalorder %s25, 0
      %p115 = por %p113, %p114
      %s117 = sadd.s32 %s116, 1
      %p120 = scmp.eq.s32.totalorder %s19, 1
      %p121 = scmp.ne.s32.totalorder %s116, %s118
      %p122 = scmp.eq.s32.totalorder %s19, 0
      %p123 = por %p121, %p122
      %p124 = scmp.ne.s32.totalorder %s116, %s118
      %p125 = scmp.eq.s32.totalorder %s24, 1
      %p126 = por %p124, %p125
      %p127 = scmp.ne.s32.totalorder %s118, %s119
      %p128 = scmp.eq.s32.totalorder %s24, 0
      %p129 = por %p127, %p128
      %p130 = scmp.ne.s32.totalorder %s118, %s119
      %p131 = scmp.eq.s32.totalorder %s25, 1
      %p132 = por %p130, %p131
      %p134 = scmp.ne.s32.totalorder %s119, %s133
      %p135 = scmp.eq.s32.totalorder %s25, 0
      %p136 = por %p134, %p135
      %s138 = sadd.s32 %s137, 1
      %p141 = scmp.eq.s32.totalorder %s19, 1
      %p142 = scmp.ne.s32.totalorder %s137, %s139
      %p143 = scmp.eq.s32.totalorder %s19, 0
      %p144 = por %p142, %p143
      %p145 = scmp.ne.s32.totalorder %s137, %s139
      %p146 = scmp.eq.s32.totalorder %s24, 1
      %p147 = por %p145, %p146
      %p148 = scmp.ne.s32.totalorder %s139, %s140
      %p149 = scmp.eq.s32.totalorder %s24, 0
      %p150 = por %p148, %p149
      %p151 = scmp.ne.s32.totalorder %s139, %s140
      %p152 = scmp.eq.s32.totalorder %s25, 1
      %p153 = por %p151, %p152
      %p155 = scmp.ne.s32.totalorder %s140, %s154
      %p156 = scmp.eq.s32.totalorder %s25, 0
      %p157 = por %p155, %p156
      %s158 = ssub.s32 %s19, %s26
      %p159 = scmp.eq.s32.totalorder %s158, 0
      %s161 = sadd.s32 %s160, 1
      %s162 = scalar_select %p159, %s160, %s161
      %p165 = pneg %p159
      %p166 = scmp.eq.s32.totalorder %s19, 1
      %p167 = por %p165, %p166
      %p168 = scmp.ne.s32.totalorder %s160, %s163
      %p169 = scmp.eq.s32.totalorder %s19, 0
      %p170 = por %p168, %p169
      %p171 = scmp.ne.s32.totalorder %s160, %s163
      %p172 = scmp.eq.s32.totalorder %s24, 1
      %p173 = por %p171, %p172
      %p174 = scmp.ne.s32.totalorder %s163, %s164
      %p175 = scmp.eq.s32.totalorder %s24, 0
      %p176 = por %p174, %p175
      %p177 = scmp.ne.s32.totalorder %s163, %s164
      %p178 = scmp.eq.s32.totalorder %s25, 1
      %p179 = por %p177, %p178
      %p181 = scmp.ne.s32.totalorder %s164, %s180
      %p182 = scmp.eq.s32.totalorder %s25, 0
      %p183 = por %p181, %p182
      %p184 = scmp.le.s32.totalorder 1, %s19
      %p185 = scmp.lt.s32.totalorder %s19, 3
      %p186 = pnand %p184, %p185
      %p187 = pneg %p186
      // Predicated region
      $region9: #{tpu_custom_call.1} parent=5 // pred_check
        _
      $region10: #{tpu_custom_call.1} parent=5 // pred_check_branch
        %189 = sbr.rel (%p186) target = $region12
      $region11: #{tpu_custom_call.1} parent=5 // pred_region
        %s190 = ssub.s32 %s19, 1
        // Predicated region
        $region13: #{tpu_custom_call.1} parent=11 // pred_check
          %p191 = pneg %p66
        $region14: #{tpu_custom_call.1} parent=11 // pred_check_branch
          %193 = sbr.rel (%p191) target = $region16
        $region15: #{tpu_custom_call.1} parent=11 // pred_region
          %s195 = ssub.s32 288, 288
          %196 = vsyncadd [#allocation6], %s195
          %s197 = sshll.u32 [#allocation5], 4
          %s198 = int_to_ptr.vmem [resolvable:$true] %s197
          %203 = dma.hbm_to_vmem [thread:$0]  %s1, 288, %s198, [#allocation6], 32, 32, 2
        $region16: #{tpu_custom_call.1} parent=11 // pred_fallthru
          _
        // Predicated region
        $region17: #{tpu_custom_call.1} parent=11 // pred_check
          %p204 = pneg %p87
        $region18: #{tpu_custom_call.1} parent=11 // pred_check_branch
          %206 = sbr.rel (%p204) target = $region20
        $region19: #{tpu_custom_call.1} parent=11 // pred_region
          _
        $region20: #{tpu_custom_call.1} parent=11 // pred_fallthru
          _
        // Predicated region
        $region21: #{tpu_custom_call.1} parent=11 // pred_check
          %p207 = pneg %p108
        $region22: #{tpu_custom_call.1} parent=11 // pred_check_branch
          %209 = sbr.rel (%p207) target = $region24
        $region23: #{tpu_custom_call.1} parent=11 // pred_region
          _
        $region24: #{tpu_custom_call.1} parent=11 // pred_fallthru
          _
        // Predicated region
        $region25: #{tpu_custom_call.1} parent=11 // pred_check
          %p210 = pneg %p129
        $region26: #{tpu_custom_call.1} parent=11 // pred_check_branch
          %212 = sbr.rel (%p210) target = $region28
        $region27: #{tpu_custom_call.1} parent=11 // pred_region
          _
        $region28: #{tpu_custom_call.1} parent=11 // pred_fallthru
          _
        // Predicated region
        $region29: #{tpu_custom_call.1} parent=11 // pred_check
          %p213 = pneg %p150
        $region30: #{tpu_custom_call.1} parent=11 // pred_check_branch
          %215 = sbr.rel (%p213) target = $region32
        $region31: #{tpu_custom_call.1} parent=11 // pred_region
          _
        $region32: #{tpu_custom_call.1} parent=11 // pred_fallthru
          _
      $region12: #{tpu_custom_call.1} parent=5 // pred_fallthru
        _
      %p216 = scmp.lt.s32.totalorder %s19, 2
      // Predicated region
      $region33: #{tpu_custom_call.1} parent=5 // pred_check
        %p217 = pneg %p216
      $region34: #{tpu_custom_call.1} parent=5 // pred_check_branch
        %219 = sbr.rel (%p217) target = $region36
      $region35: #{tpu_custom_call.1} parent=5 // pred_region
        // Predicated region
        $region37: #{tpu_custom_call.1} parent=35 // pred_check
          %p220 = pneg %p39
        $region38: #{tpu_custom_call.1} parent=35 // pred_check_branch
          %222 = sbr.rel (%p220) target = $region40
        $region39: #{tpu_custom_call.1} parent=35 // pred_region
          %s223 = sand.u32 %s29, 1
          %s224 = scalar_lea.sflag [#allocation3], %s223
          %s225 = sand.u32 %s29, 1
          %s226 = smul.addr %s225, 8
          %s227 = scalar_lea.vmem [#allocation2], %s226
          %s229 = ssub.s32 128, 128
          %230 = vsyncadd %s224, %s229
          %s231 = smul.addr %s19, 2
          %s232 = smul.addr %s231, 64
          %s233 = scalar_lea.hbm %s0, %s232
          %s235 = sshll.u32 %s227, 4
          %s236 = int_to_ptr.vmem [resolvable:$true] %s235
          %238 = dma.hbm_to_vmem [thread:$0]  %s233, 128, %s236, %s224
        $region40: #{tpu_custom_call.1} parent=35 // pred_fallthru
          _
      $region36: #{tpu_custom_call.1} parent=5 // pred_fallthru
        _
      %p239 = scmp.le.s32.totalorder 1, %s19
      %p240 = scmp.lt.s32.totalorder %s19, 3
      %p241 = pnand %p239, %p240
      %p242 = pneg %p241
      // Predicated region
      $region41: #{tpu_custom_call.1} parent=5 // pred_check
        _
      $region42: #{tpu_custom_call.1} parent=5 // pred_check_branch
        %244 = sbr.rel (%p241) target = $region44
      $region43: #{tpu_custom_call.1} parent=5 // pred_region
        %s245 = ssub.s32 %s19, 1
        %s246 = sand.u32 %s32, 1
        %s247 = scalar_lea.sflag [#allocation3], %s246
        %s248 = sand.u32 %s32, 1
        %s249 = smul.addr %s248, 8
        %s250 = scalar_lea.vmem [#allocation2], %s249
        // Predicated region
        $region45: #{tpu_custom_call.1} parent=43 // pred_check
          %p251 = pneg %p45
        $region46: #{tpu_custom_call.1} parent=43 // pred_check_branch
          %253 = sbr.rel (%p251) target = $region48
        $region47: #{tpu_custom_call.1} parent=43 // pred_region
          %254 = dma.done %s247, 128
        $region48: #{tpu_custom_call.1} parent=43 // pred_fallthru
          _
        // Predicated region
        $region49: #{tpu_custom_call.1} parent=43 // pred_check
          %p255 = pneg %p66
        $region50: #{tpu_custom_call.1} parent=43 // pred_check_branch
          %257 = sbr.rel (%p255) target = $region52
        $region51: #{tpu_custom_call.1} parent=43 // pred_region
          %258 = dma.done [#allocation6], 288
        $region52: #{tpu_custom_call.1} parent=43 // pred_fallthru
          _
        %s259 = sand.u32 %s32, 1
        %s260 = scalar_lea.sflag [#allocation3], %s259
        %s261 = sand.u32 %s32, 1
        %s262 = smul.addr %s261, 8
        %s263 = scalar_lea.vmem [#allocation2], %s262
        %p264 = pneg %p45
        %p265 = pneg %p42
        %p266 = pneg %p66
        %p267 = pneg %p63
        %p268 = pneg %p87
        %p269 = pneg %p84
        %p270 = pneg %p108
        %p271 = pneg %p105
        %p272 = pneg %p129
        %p273 = pneg %p126
        %p274 = pneg %p150
        %p275 = pneg %p147
        %p276 = pneg %p176
        %p277 = pneg %p173
        %s278 = sand.u32 %s163, 1
        %s279 = scalar_lea.sflag [#allocation4], %s278
        %s280 = sand.u32 %s163, 1
        %s281 = smul.addr %s280, 8
        %s282 = scalar_lea.vmem [#allocation7], %s281
        %v284 = vld [vmem:[%s250] sm:$0xff]
        %v286 = vcombine.high %v284, %v284
        %287 = vrot.lane.b32.xlu0 %v286, 17
        %v288 = vpop.permute.xlu0 %287
        %290 = vrot.lane.b32.xlu0 %v284, 17
        %v291 = vpop.permute.xlu0 %290
        %vm292 = vcmask 138240
        %v293 = vsel %vm292, %v291, %v288
        %v296 = vsel %vm292, %v288, %v291
        %v297 = vld [vmem:[#allocation5] sm:$0x3]
        %v299 = vlaneseq
        %v300 = vshrl.u32 %v299, 7
        %v301 = vsub.s32 0, %v300
        %v302 = vrot.slane %v297, %v301
        %v303 = vlaneseq
        %v304 = vshrl.u32 %v303, 7
        %v305 = vsub.s32 1, %v304
        %v306 = vrot.slane %v297, %v305
        %v309 = vmul.f32 %v296, %v302
        %v310 = vmul.f32 %v293, %v306
        %311 = vrot.lane.b32.xlu0 %v286, 16
        %v312 = vpop.permute.xlu0 %311
        %314 = vrot.lane.b32.xlu0 %v284, 16
        %v315 = vpop.permute.xlu0 %314
        %vm316 = vcmask 130048
        %v317 = vsel %vm316, %v315, %v312
        %v320 = vsel %vm316, %v312, %v315
        %s321 = scalar_lea.vmem [#allocation5], 2
        %v322 = vld [vmem:[%s321] sm:$0x3]
        %v324 = vlaneseq
        %v325 = vshrl.u32 %v324, 7
        %v326 = vsub.s32 0, %v325
        %v327 = vrot.slane %v322, %v326
        %v328 = vlaneseq
        %v329 = vshrl.u32 %v328, 7
        %v330 = vsub.s32 1, %v329
        %v331 = vrot.slane %v322, %v330
        %v334 = vmul.f32 %v320, %v327
        %v335 = vmul.f32 %v317, %v331
        %336 = vrot.lane.b32.xlu0 %v286, 15
        %v337 = vpop.permute.xlu0 %336
        %339 = vrot.lane.b32.xlu0 %v284, 15
        %v340 = vpop.permute.xlu0 %339
        %vm341 = vcmask 121856
        %v342 = vsel %vm341, %v340, %v337
        %v345 = vsel %vm341, %v337, %v340
        %s346 = scalar_lea.vmem [#allocation5], 4
        %v347 = vld [vmem:[%s346] sm:$0x3]
        %v349 = vlaneseq
        %v350 = vshrl.u32 %v349, 7
        %v351 = vsub.s32 0, %v350
        %v352 = vrot.slane %v347, %v351
        %v353 = vlaneseq
        %v354 = vshrl.u32 %v353, 7
        %v355 = vsub.s32 1, %v354
        %v356 = vrot.slane %v347, %v355
        %v359 = vmul.f32 %v345, %v352
        %v360 = vmul.f32 %v342, %v356
        %361 = vrot.lane.b32.xlu0 %v286, 1
        %v362 = vpop.permute.xlu0 %361
        %364 = vrot.lane.b32.xlu0 %v284, 1
        %v365 = vpop.permute.xlu0 %364
        %vm366 = vcmask 7168
        %v367 = vsel %vm366, %v365, %v362
        %v370 = vsel %vm366, %v362, %v365
        %s371 = scalar_lea.vmem [#allocation5], 6
        %v372 = vld [vmem:[%s371] sm:$0x3]
        %v374 = vlaneseq
        %v375 = vshrl.u32 %v374, 7
        %v376 = vsub.s32 0, %v375
        %v377 = vrot.slane %v372, %v376
        %v378 = vlaneseq
        %v379 = vshrl.u32 %v378, 7
        %v380 = vsub.s32 1, %v379
        %v381 = vrot.slane %v372, %v380
        %v384 = vmul.f32 %v370, %v377
        %v385 = vmul.f32 %v367, %v381
        %386 = vrot.lane.b32.xlu0 %v284, 127
        %v387 = vpop.permute.xlu0 %386
        %388 = vrot.lane.b32.xlu0 %v286, 127
        %v389 = vpop.permute.xlu0 %388
        %vm390 = vcmask 1039360
        %v391 = vsel %vm390, %v387, %v389
        %v395 = vsel %vm390, %v389, %v387
        %s396 = scalar_lea.vmem [#allocation5], 10
        %v397 = vld [vmem:[%s396] sm:$0x3]
        %v399 = vlaneseq
        %v400 = vshrl.u32 %v399, 7
        %v401 = vsub.s32 0, %v400
        %v402 = vrot.slane %v397, %v401
        %v403 = vlaneseq
        %v404 = vshrl.u32 %v403, 7
        %v405 = vsub.s32 1, %v404
        %v406 = vrot.slane %v397, %v405
        %v409 = vmul.f32 %v391, %v402
        %v410 = vmul.f32 %v395, %v406
        %411 = vrot.lane.b32.xlu0 %v284, 113
        %v412 = vpop.permute.xlu0 %411
        %413 = vrot.lane.b32.xlu0 %v286, 113
        %v414 = vpop.permute.xlu0 %413
        %vm415 = vcmask 924672
        %v416 = vsel %vm415, %v412, %v414
        %v420 = vsel %vm415, %v414, %v412
        %s421 = scalar_lea.vmem [#allocation5], 12
        %v422 = vld [vmem:[%s421] sm:$0x3]
        %v424 = vlaneseq
        %v425 = vshrl.u32 %v424, 7
        %v426 = vsub.s32 0, %v425
        %v427 = vrot.slane %v422, %v426
        %v428 = vlaneseq
        %v429 = vshrl.u32 %v428, 7
        %v430 = vsub.s32 1, %v429
        %v431 = vrot.slane %v422, %v430
        %v434 = vmul.f32 %v416, %v427
        %v435 = vmul.f32 %v420, %v431
        %436 = vrot.lane.b32.xlu0 %v284, 112
        %v437 = vpop.permute.xlu0 %436
        %438 = vrot.lane.b32.xlu0 %v286, 112
        %v439 = vpop.permute.xlu0 %438
        %vm440 = vcmask 916480
        %v441 = vsel %vm440, %v437, %v439
        %v445 = vsel %vm440, %v439, %v437
        %s446 = scalar_lea.vmem [#allocation5], 14
        %v447 = vld [vmem:[%s446] sm:$0x3]
        %v449 = vlaneseq
        %v450 = vshrl.u32 %v449, 7
        %v451 = vsub.s32 0, %v450
        %v452 = vrot.slane %v447, %v451
        %v453 = vlaneseq
        %v454 = vshrl.u32 %v453, 7
        %v455 = vsub.s32 1, %v454
        %v456 = vrot.slane %v447, %v455
        %v459 = vmul.f32 %v441, %v452
        %v460 = vmul.f32 %v445, %v456
        %461 = vrot.lane.b32.xlu0 %v284, 111
        %v462 = vpop.permute.xlu0 %461
        %463 = vrot.lane.b32.xlu0 %v286, 111
        %v464 = vpop.permute.xlu0 %463
        %vm465 = vcmask 908288
        %v466 = vsel %vm465, %v462, %v464
        %v470 = vsel %vm465, %v464, %v462
        %s471 = scalar_lea.vmem [#allocation5], 16
        %v472 = vld [vmem:[%s471] sm:$0x3]
        %v474 = vlaneseq
        %v475 = vshrl.u32 %v474, 7
        %v476 = vsub.s32 0, %v475
        %v477 = vrot.slane %v472, %v476
        %v478 = vlaneseq
        %v479 = vshrl.u32 %v478, 7
        %v480 = vsub.s32 1, %v479
        %v481 = vrot.slane %v472, %v480
        %v484 = vmul.f32 %v466, %v477
        %v485 = vmul.f32 %v470, %v481
        %v488 = vrot.slane %v334, 4
        %v489 = vrot.slane %v335, 4
        %v494 = vrot.slane %v384, 4
        %v495 = vrot.slane %v385, 4
        %v501 = vrot.slane %v409, 4
        %v502 = vrot.slane %v410, 4
        %v507 = vrot.slane %v459, 4
        %v508 = vrot.slane %v460, 4
        %vm511 = vcmask 1043456
        %v512 = vsel %vm511, %v309, %v488
        %v513 = vsel %vm511, %v310, %v489
        %v514 = vsel %vm511, %v359, %v494
        %v515 = vsel %vm511, %v360, %v495
        %v516 = vsel %vm511, %v284, %v501
        %v517 = vsel %vm511, %v286, %v502
        %v518 = vsel %vm511, %v434, %v507
        %v519 = vsel %vm511, %v435, %v508
        %v520 = vpack.c.bf16 %v514, %v512
        %v521 = vpack.c.bf16 %v515, %v513
        %v522 = vpack.c.bf16 %v518, %v516
        %v523 = vpack.c.bf16 %v519, %v517
        %v524 = vpack.c.bf16 %v484, %v484
        %v525 = vpack.c.bf16 %v485, %v485
        %v526 = vld [vmem:[%s2] sm:$0x3]
        %v527 = vld [vmem:[%s3] sm:$0xf]
        %529 = vset.pattern.permute.xlu0 0
        %530 = vperm.xlu0 %529, %v527
        %v531 = vpop.permute.xlu0 %530
        %vm533 = vcmask 293888
        %v535 = vsel %vm533, %v526, 0
        %vm537 = vcmask 1041408
        %v539 = vsel %vm537, %v524, 0
        %v542 = vsel %vm537, %v525, 0
        %544 = vmatprep.subr.bf16.mxu0 0
        %545 = vmatpush1.bf16.msra.mxu0 0
        %546 = vmatprep.subr.bf16.mxu0 0
        %547 = vmatpush1.bf16.msra.mxu0 0
        %548 = vmatprep.subr.bf16.mxu0 0
        %549 = vmatpush1.bf16.msra.mxu0 0
        %550 = vmatprep.subr.bf16.mxu0 0
        %551 = vmatpush1.bf16.msra.mxu0 0
        %552 = vmatprep.subr.bf16.mxu0 0
        %553 = vmatpush1.bf16.msra.mxu0 0
        %554 = vmatprep.subr.bf16.mxu0 %v542
        %555 = vmatpush1.bf16.msra.mxu0 %v539
        %556 = vmatprep.subr.bf16.mxu0 %v523
        %557 = vmatpush1.bf16.msra.mxu0 %v522
        %558 = vmatprep.subr.bf16.mxu0 %v521
        %559 = vmatpush1.bf16.msra.mxu0 %v520
        %560 = vmatprep.subr.bf16.mxu0 0
        %561 = vmatpush2.bf16.msra.mxu0 0
        %562 = vmatprep.subr.bf16.mxu0 0
        %563 = vmatpush2.bf16.msra.mxu0 0
        %564 = vmatprep.subr.bf16.mxu0 0
        %565 = vmatpush2.bf16.msra.mxu0 0
        %566 = vmatprep.subr.bf16.mxu0 0
        %567 = vmatpush2.bf16.msra.mxu0 0
        %568 = vmatprep.subr.bf16.mxu0 0
        %569 = vmatpush2.bf16.msra.mxu0 0
        %570 = vmatprep.subr.bf16.mxu0 0
        %571 = vmatpush2.bf16.msra.mxu0 0
        %572 = vmatprep.subr.bf16.mxu0 0
        %573 = vmatpush2.bf16.msra.mxu0 0
        %574 = vmatprep.subr.bf16.mxu0 0
        %575 = vmatpush2.bf16.msra.mxu0 0
        %576 = vmatprep.mubr.bf16.mxu0 0
        %577 = vmatmul.mubr.bf16.gmra.mxu0 %v535
        %v578 = vpop.f32.mrf.mxu0
        %v579 = vadd.f32 %v531, %v578
        %v580 = vpop.f32.mrf.mxu0
        %v581 = vadd.f32 %v531, %v580
        %v582 = vpop.f32.mrf.mxu0
        %v583 = vpop.f32.mrf.mxu0
        %584 = vdwg.mxu0
        %v585 = vmax.f32 %v579, 0.0
        %v586 = vmax.f32 %v581, 0.0
        %588 = vrot.lane.b32.xlu0 %v586, 17
        %v589 = vpop.permute.xlu0 %588
        %592 = vrot.lane.b32.xlu0 %v585, 17
        %v593 = vpop.permute.xlu0 %592
        %v594 = vsel %vm292, %v593, %v589
        %v597 = vsel %vm292, %v589, %v593
        %v598 = vmul.f32 %v597, %v302
        %v599 = vmul.f32 %v594, %v306
        %600 = vrot.lane.b32.xlu0 %v586, 16
        %v601 = vpop.permute.xlu0 %600
        %603 = vrot.lane.b32.xlu0 %v585, 16
        %v604 = vpop.permute.xlu0 %603
        %v605 = vsel %vm316, %v604, %v601
        %v608 = vsel %vm316, %v601, %v604
        %v609 = vmul.f32 %v608, %v327
        %v610 = vmul.f32 %v605, %v331
        %611 = vrot.lane.b32.xlu0 %v586, 15
        %v612 = vpop.permute.xlu0 %611
        %614 = vrot.lane.b32.xlu0 %v585, 15
        %v615 = vpop.permute.xlu0 %614
        %v616 = vsel %vm341, %v615, %v612
        %v619 = vsel %vm341, %v612, %v615
        %v620 = vmul.f32 %v619, %v352
        %v621 = vmul.f32 %v616, %v356
        %622 = vrot.lane.b32.xlu0 %v586, 1
        %v623 = vpop.permute.xlu0 %622
        %625 = vrot.lane.b32.xlu0 %v585, 1
        %v626 = vpop.permute.xlu0 %625
        %v627 = vsel %vm366, %v626, %v623
        %v630 = vsel %vm366, %v623, %v626
        %v631 = vmul.f32 %v630, %v377
        %v632 = vmul.f32 %v627, %v381
        %633 = vrot.lane.b32.xlu0 %v585, 127
        %v634 = vpop.permute.xlu0 %633
        %635 = vrot.lane.b32.xlu0 %v586, 127
        %v636 = vpop.permute.xlu0 %635
        %v637 = vsel %vm390, %v634, %v636
        %v641 = vsel %vm390, %v636, %v634
        %v642 = vmul.f32 %v637, %v402
        %v643 = vmul.f32 %v641, %v406
        %644 = vrot.lane.b32.xlu0 %v585, 113
        %v645 = vpop.permute.xlu0 %644
        %646 = vrot.lane.b32.xlu0 %v586, 113
        %v647 = vpop.permute.xlu0 %646
        %v648 = vsel %vm415, %v645, %v647
        %v652 = vsel %vm415, %v647, %v645
        %v653 = vmul.f32 %v648, %v427
        %v654 = vmul.f32 %v652, %v431
        %655 = vrot.lane.b32.xlu0 %v585, 112
        %v656 = vpop.permute.xlu0 %655
        %657 = vrot.lane.b32.xlu0 %v586, 112
        %v658 = vpop.permute.xlu0 %657
        %v659 = vsel %vm440, %v656, %v658
        %v663 = vsel %vm440, %v658, %v656
        %v664 = vmul.f32 %v659, %v452
        %v665 = vmul.f32 %v663, %v456
        %666 = vrot.lane.b32.xlu0 %v585, 111
        %v667 = vpop.permute.xlu0 %666
        %668 = vrot.lane.b32.xlu0 %v586, 111
        %v669 = vpop.permute.xlu0 %668
        %v670 = vsel %vm465, %v667, %v669
        %v674 = vsel %vm465, %v669, %v667
        %v675 = vmul.f32 %v670, %v477
        %v676 = vmul.f32 %v674, %v481
        %v679 = vrot.slane %v609, 4
        %v680 = vrot.slane %v610, 4
        %v685 = vrot.slane %v631, 4
        %v686 = vrot.slane %v632, 4
        %v691 = vrot.slane %v642, 4
        %v692 = vrot.slane %v643, 4
        %v697 = vrot.slane %v664, 4
        %v698 = vrot.slane %v665, 4
        %v701 = vsel %vm511, %v598, %v679
        %v702 = vsel %vm511, %v599, %v680
        %v703 = vsel %vm511, %v620, %v685
        %v704 = vsel %vm511, %v621, %v686
        %v705 = vsel %vm511, %v585, %v691
        %v706 = vsel %vm511, %v586, %v692
        %v707 = vsel %vm511, %v653, %v697
        %v708 = vsel %vm511, %v654, %v698
        %v709 = vpack.c.bf16 %v703, %v701
        %v710 = vpack.c.bf16 %v704, %v702
        %v711 = vpack.c.bf16 %v707, %v705
        %v712 = vpack.c.bf16 %v708, %v706
        %v713 = vpack.c.bf16 %v675, %v675
        %v714 = vpack.c.bf16 %v676, %v676
        %v715 = vld [vmem:[%s4] sm:$0x3]
        %v716 = vld [vmem:[%s5] sm:$0xf]
        %718 = vset.pattern.permute.xlu0 0
        %719 = vperm.xlu0 %718, %v716
        %v720 = vpop.permute.xlu0 %719
        %v723 = vsel %vm533, %v715, 0
        %v726 = vsel %vm537, %v713, 0
        %v729 = vsel %vm537, %v714, 0
        %731 = vmatprep.subr.bf16.mxu0 0
        %732 = vmatpush1.bf16.msra.mxu0 0
        %733 = vmatprep.subr.bf16.mxu0 0
        %734 = vmatpush1.bf16.msra.mxu0 0
        %735 = vmatprep.subr.bf16.mxu0 0
        %736 = vmatpush1.bf16.msra.mxu0 0
        %737 = vmatprep.subr.bf16.mxu0 0
        %738 = vmatpush1.bf16.msra.mxu0 0
        %739 = vmatprep.subr.bf16.mxu0 0
        %740 = vmatpush1.bf16.msra.mxu0 0
        %741 = vmatprep.subr.bf16.mxu0 %v729
        %742 = vmatpush1.bf16.msra.mxu0 %v726
        %743 = vmatprep.subr.bf16.mxu0 %v712
        %744 = vmatpush1.bf16.msra.mxu0 %v711
        %745 = vmatprep.subr.bf16.mxu0 %v710
        %746 = vmatpush1.bf16.msra.mxu0 %v709
        %747 = vmatprep.subr.bf16.mxu0 0
        %748 = vmatpush2.bf16.msra.mxu0 0
        %749 = vmatprep.subr.bf16.mxu0 0
        %750 = vmatpush2.bf16.msra.mxu0 0
        %751 = vmatprep.subr.bf16.mxu0 0
        %752 = vmatpush2.bf16.msra.mxu0 0
        %753 = vmatprep.subr.bf16.mxu0 0
        %754 = vmatpush2.bf16.msra.mxu0 0
        %755 = vmatprep.subr.bf16.mxu0 0
        %756 = vmatpush2.bf16.msra.mxu0 0
        %757 = vmatprep.subr.bf16.mxu0 0
        %758 = vmatpush2.bf16.msra.mxu0 0
        %759 = vmatprep.subr.bf16.mxu0 0
        %760 = vmatpush2.bf16.msra.mxu0 0
        %761 = vmatprep.subr.bf16.mxu0 0
        %762 = vmatpush2.bf16.msra.mxu0 0
        %763 = vmatprep.mubr.bf16.mxu0 0
        %764 = vmatmul.mubr.bf16.gmra.mxu0 %v723
        %v765 = vpop.f32.mrf.mxu0
        %v766 = vadd.f32 %v720, %v765
        %v767 = vpop.f32.mrf.mxu0
        %v768 = vadd.f32 %v720, %v767
        %v769 = vpop.f32.mrf.mxu0
        %v770 = vpop.f32.mrf.mxu0
        %771 = vdwg.mxu0
        %v772 = vmul.f32 %v766, 0.5
        %v773 = vmul.f32 %v768, 0.5
        %v776 = vcombine.low %v772, %v773
        %v778 = vadd.f32 %v284, %v776
        %779 = vst [vmem:[%s282] sm:$0xff] %v778
        %s780 = sand.u32 %s163, 1
        %s781 = scalar_lea.sflag [#allocation4], %s780
        %s782 = sand.u32 %s163, 1
        %s783 = smul.addr %s782, 8
        %s784 = scalar_lea.vmem [#allocation7], %s783
        // Predicated region
        $region53: #{tpu_custom_call.1} parent=43 // pred_check
          %p785 = pneg %p173
        $region54: #{tpu_custom_call.1} parent=43 // pred_check_branch
          %787 = sbr.rel (%p785) target = $region56
        $region55: #{tpu_custom_call.1} parent=43 // pred_region
          %s789 = ssub.s32 128, 128
          %790 = vsyncadd %s781, %s789
          %s791 = smul.addr %s24, 2
          %s792 = smul.addr %s791, 64
          %s793 = scalar_lea.hbm %s6, %s792
          %s795 = sshll.u32 %s784, 4
          %s796 = int_to_ptr.vmem [resolvable:$true] %s795
          %798 = dma.vmem_to_hbm [thread:$0]  %s796, 128, %s793, %s781
        $region56: #{tpu_custom_call.1} parent=43 // pred_fallthru
          _
      $region44: #{tpu_custom_call.1} parent=5 // pred_fallthru
        _
      %p799 = scmp.le.s32.totalorder 2, %s19
      // Predicated region
      $region57: #{tpu_custom_call.1} parent=5 // pred_check
        %p800 = pneg %p799
      $region58: #{tpu_custom_call.1} parent=5 // pred_check_branch
        %802 = sbr.rel (%p800) target = $region60
      $region59: #{tpu_custom_call.1} parent=5 // pred_region
        %s803 = ssub.s32 %s19, 2
        // Predicated region
        $region61: #{tpu_custom_call.1} parent=59 // pred_check
          %p804 = pneg %p179
        $region62: #{tpu_custom_call.1} parent=59 // pred_check_branch
          %806 = sbr.rel (%p804) target = $region64
        $region63: #{tpu_custom_call.1} parent=59 // pred_region
          %s807 = sand.u32 %s164, 1
          %s808 = scalar_lea.sflag [#allocation4], %s807
          %s809 = sand.u32 %s164, 1
          %s810 = smul.addr %s809, 8
          %s811 = scalar_lea.vmem [#allocation7], %s810
          %812 = dma.done %s808, 128
        $region64: #{tpu_custom_call.1} parent=59 // pred_fallthru
          _
      $region60: #{tpu_custom_call.1} parent=5 // pred_fallthru
        _
    $region6: #{tpu_custom_call.1} parent=1 // loop_footer
      %s23 = sadd.s32 1, %s19
    $region7: #{tpu_custom_call.1} parent=1 // loop_footer_branch
      %18 = sbr.rel target = $region3
    $region8: #{tpu_custom_call.1} parent=1 // loop_exit
      _
    %813 = vsyncpa [#allocation3], 1
    %s814 = scalar_lea.sflag [#allocation3], 1
    %815 = vsyncpa %s814, 1
    %816 = vsyncpa [#allocation6], 1
    %817 = vsyncpa [#allocation4], 1
    %s818 = scalar_lea.sflag [#allocation4], 1
    %819 = vsyncpa %s818, 1

</llo_original>
